<compile_context>
chip_gen: v7x
topology: tpu7x:2x2x1
jax: 0.10.0
libtpu: 0.0.40
codegen_flags: <defaults>
</compile_context>

<pallas_src>
import jax
import jax.numpy as jnp
from jax.experimental import pallas as pl
from jax.experimental.pallas import tpu as pltpu

HIDDEN = 512


def critic_kernel(
    x_ref,    # (TB, d_in)  f32  — concatenated [state, action] tile
    w1_ref,   # (d_in, H)   bf16
    b1_ref,   # (1, H)      f32
    w2_ref,   # (H, H)      bf16
    b2_ref,   # (1, H)      f32
    w3_ref,   # (1, H)      bf16
    b3_ref,   # (1, 1)      f32  (SMEM)
    o_ref,    # (TB, 1)     f32
):
    # Layer 1: single merged matmul over the concatenated input (K = d_in).
    x = x_ref[...].astype(jnp.bfloat16)
    h1 = jnp.dot(x, w1_ref[...], preferred_element_type=jnp.float32) + b1_ref[...]
    h1 = jnp.maximum(h1, 0.0)

    # Layer 2: (TB, H) @ (H, H), bf16 inputs, f32 accumulation on the MXU.
    h2 = (
        jnp.dot(h1.astype(jnp.bfloat16), w2_ref[...],
                preferred_element_type=jnp.float32)
        + b2_ref[...]
    )
    h2 = jnp.maximum(h2, 0.0)

    # Layer 3: (H -> 1) as a VPU multiply + lane (XLU) reduction — keeps the
    # MXU free and avoids a lane-sparse N=1 matmul result column.
    w3_row = w3_ref[...].astype(jnp.float32)                  # (1, H)
    out = jnp.sum(h2 * w3_row, axis=-1, keepdims=True) + b3_ref[0, 0]
    o_ref[...] = out.astype(o_ref.dtype)


def _round_up(x, m):
    return ((x + m - 1) // m) * m


def _pick_batch_tile(B, block_b):
    """Large tile to amortize per-step overhead, but >=2 grid steps on big B
    so the 'parallel' axis can shard across both v7x TensorCores."""
    if B <= 16:
        return B
    return min(block_b, _round_up(pl.cdiv(B, 2), 8))


def critic_forward(state, action, params, *, block_b=512):
    """state: (B, state_dim) f32, action: (B, action_dim) f32 -> (B, 1) f32."""
    w1, b1, w2, b2, w3, b3 = params
    B, state_dim = state.shape
    action_dim = action.shape[1]
    d_in = state_dim + action_dim
    H = w2.shape[0]

    # Concat in the wrapper (cheap XLA op, ~96 B/row) so the kernel does one
    # merged K=d_in matmul instead of two tiny-K matmuls.
    x = jnp.concatenate([state, action], axis=1)

    tb = _pick_batch_tile(B, block_b)
    grid = (pl.cdiv(B, tb),)

    row_tile = lambda i: (i, 0)   # activation / output tiles walk the batch
    resident = lambda i: (0, 0)   # weights & biases stay put across grid steps

    out = pl.pallas_call(
        critic_kernel,
        out_shape=jax.ShapeDtypeStruct((B, 1), jnp.float32),
        grid=grid,
        in_specs=[
            pl.BlockSpec((tb, d_in), row_tile),
            pl.BlockSpec((d_in, H), resident),
            pl.BlockSpec((1, H), resident),
            pl.BlockSpec((H, H), resident),
            pl.BlockSpec((1, H), resident),
            pl.BlockSpec((1, H), resident),
            pl.BlockSpec(memory_space=pltpu.MemorySpace.SMEM),  # b3 (1,1) scalar
        ],
        out_specs=pl.BlockSpec((tb, 1), row_tile),
        compiler_params=pltpu.CompilerParams(
            dimension_semantics=("parallel",),
        ),
    )(x, w1, b1, w2, b2, w3, b3)
    return out


def init_params(key, state_dim, action_dim, hidden=HIDDEN):
    """Deterministic init matching the PyTorch module's shapes.

    Weights are stored transposed relative to PyTorch ((in, out)); W3 is a
    (1, hidden) row for the VPU head; matmul weights live in bf16, biases f32.
    """
    ks = jax.random.split(key, 6)
    d_in = state_dim + action_dim

    def linear(kw, kb, fan_in, fan_out):
        bound = 1.0 / jnp.sqrt(jnp.float32(fan_in))
        w = jax.random.uniform(kw, (fan_in, fan_out), jnp.float32, -bound, bound)
        b = jax.random.uniform(kb, (1, fan_out), jnp.float32, -bound, bound)
        return w, b

    w1, b1 = linear(ks[0], ks[1], d_in, hidden)
    w2, b2 = linear(ks[2], ks[3], hidden, hidden)
    w3, b3 = linear(ks[4], ks[5], hidden, 1)

    w1 = w1.astype(jnp.bfloat16)
    w2 = w2.astype(jnp.bfloat16)
    w3 = w3.T.astype(jnp.bfloat16)           # (1, hidden) row for the VPU head
    b3 = b3.reshape(1, 1)                    # (1, 1) scalar, lives in SMEM
    # TODO(synk): optional int8 W2 (+per-channel scales) for v5e/v6e only; the
    # v7x MXU has no int path, so it is not applied here.
    return (w1, b1, w2, b2, w3, b3)


def critic_ref(state, action, params):
    """Pure-JAX reference mirroring the kernel's numerics (bf16 dots, f32 acc)."""
    w1, b1, w2, b2, w3, b3 = params
    x = jnp.concatenate([state, action], axis=1).astype(jnp.bfloat16)
    h1 = jnp.dot(x, w1, preferred_element_type=jnp.float32) + b1
    h1 = jnp.maximum(h1, 0.0)
    h2 = jnp.dot(h1.astype(jnp.bfloat16), w2, preferred_element_type=jnp.float32) + b2
    h2 = jnp.maximum(h2, 0.0)
    return jnp.sum(h2 * w3.astype(jnp.float32), axis=-1, keepdims=True) + b3[0, 0]


if __name__ == "__main__":
    key = jax.random.PRNGKey(0)
    k_s, k_a, k_p = jax.random.split(key, 3)

    state_dim, action_dim = 16, 8
    params = init_params(k_p, state_dim, action_dim)

    # Small batch: single grid step, full-array tile.
    batch = 8
    state = jax.random.normal(k_s, (batch, state_dim), jnp.float32)
    action = jax.random.normal(k_a, (batch, action_dim), jnp.float32)
    out = jax.block_until_ready(critic_forward(state, action, params))
    ref = critic_ref(state, action, params)
    assert out.shape == (batch, 1)
    assert jnp.allclose(out, ref, atol=5e-3, rtol=5e-3)

    # Larger, non-multiple-of-tile batch: exercises the >=2-step grid (v7x
    # megacore path) and partial-tile masking on the last block.
    batch2 = 200
    state2 = jax.random.normal(k_s, (batch2, state_dim), jnp.float32)
    action2 = jax.random.normal(k_a, (batch2, action_dim), jnp.float32)
    out2 = jax.block_until_ready(critic_forward(state2, action2, params))
    ref2 = critic_ref(state2, action2, params)
    assert out2.shape == (batch2, 1)
    assert jnp.allclose(out2, ref2, atol=5e-3, rtol=5e-3)

    print("KERNEL_OK")
</pallas_src>

<mosaic_0001>
module attributes {stable_mosaic.version = 11 : i64} {
  func.func @critic_kernel(%arg0: i32, %arg1: memref<8x24xf32, #tpu.memory_space<vmem>>, %arg2: memref<24x512xbf16, #tpu.memory_space<vmem>>, %arg3: memref<1x512xf32, #tpu.memory_space<vmem>>, %arg4: memref<512x512xbf16, #tpu.memory_space<vmem>>, %arg5: memref<1x512xf32, #tpu.memory_space<vmem>>, %arg6: memref<1x512xbf16, #tpu.memory_space<vmem>>, %arg7: memref<1x1xf32, #tpu.memory_space<smem>>, %arg8: memref<8x1xf32, #tpu.memory_space<vmem>>) attributes {dimension_semantics = [#tpu.dimension_semantics<parallel>], iteration_bounds = array<i64: 1>, scalar_prefetch = 0 : i64, scratch_operands = 0 : i64, tpu.core_type = #tpu.core_type<tc>, window_params = [{transform_indices = @transform_0, window_bounds = array<i64: 8, 24>}, {pipeline_mode = #tpu.pipeline_mode<synchronous>, transform_indices = @transform_1, window_bounds = array<i64: 24, 512>}, {pipeline_mode = #tpu.pipeline_mode<synchronous>, transform_indices = @transform_2, window_bounds = array<i64: 1, 512>}, {pipeline_mode = #tpu.pipeline_mode<synchronous>, transform_indices = @transform_3, window_bounds = array<i64: 512, 512>}, {pipeline_mode = #tpu.pipeline_mode<synchronous>, transform_indices = @transform_4, window_bounds = array<i64: 1, 512>}, {pipeline_mode = #tpu.pipeline_mode<synchronous>, transform_indices = @transform_5, window_bounds = array<i64: 1, 512>}, {transform_indices = @transform_6, window_bounds = array<i64: 1, 1>}, {transform_indices = @transform_7, window_bounds = array<i64: 8, 1>}]} {
    %c0 = arith.constant 0 : index
    %c0_0 = arith.constant 0 : index
    %0 = vector.load %arg1[%c0, %c0_0] : memref<8x24xf32, #tpu.memory_space<vmem>>, vector<8x24xf32>
    %1 = arith.truncf %0 : vector<8x24xf32> to vector<8x24xbf16>
    %c0_1 = arith.constant 0 : index
    %c0_2 = arith.constant 0 : index
    %2 = vector.load %arg2[%c0_1, %c0_2] : memref<24x512xbf16, #tpu.memory_space<vmem>>, vector<24x512xbf16>
    %cst = arith.constant dense<0.000000e+00> : vector<8x512xf32>
    %3 = tpu.matmul %1, %2, %cst {dimension_numbers = #tpu.dot_dimension_numbers<[1], [0], [0], [1], [0, 0, 1, 1], [], []>} : vector<8x24xbf16>, vector<24x512xbf16>, vector<8x512xf32> -> vector<8x512xf32>
    %c0_3 = arith.constant 0 : index
    %c0_4 = arith.constant 0 : index
    %4 = vector.load %arg3[%c0_3, %c0_4] : memref<1x512xf32, #tpu.memory_space<vmem>>, vector<1x512xf32>
    %5 = vector.broadcast %4 : vector<1x512xf32> to vector<8x512xf32>
    %6 = arith.addf %3, %5 : vector<8x512xf32>
    %cst_5 = arith.constant 0.000000e+00 : f32
    %7 = vector.broadcast %cst_5 : f32 to vector<8x512xf32>
    %8 = arith.maximumf %6, %7 : vector<8x512xf32>
    %9 = arith.truncf %8 : vector<8x512xf32> to vector<8x512xbf16>
    %c0_6 = arith.constant 0 : index
    %c0_7 = arith.constant 0 : index
    %10 = vector.load %arg4[%c0_6, %c0_7] : memref<512x512xbf16, #tpu.memory_space<vmem>>, vector<512x512xbf16>
    %cst_8 = arith.constant dense<0.000000e+00> : vector<8x512xf32>
    %11 = tpu.matmul %9, %10, %cst_8 {dimension_numbers = #tpu.dot_dimension_numbers<[1], [0], [0], [1], [0, 0, 1, 1], [], []>} : vector<8x512xbf16>, vector<512x512xbf16>, vector<8x512xf32> -> vector<8x512xf32>
    %c0_9 = arith.constant 0 : index
    %c0_10 = arith.constant 0 : index
    %12 = vector.load %arg5[%c0_9, %c0_10] : memref<1x512xf32, #tpu.memory_space<vmem>>, vector<1x512xf32>
    %13 = vector.broadcast %12 : vector<1x512xf32> to vector<8x512xf32>
    %14 = arith.addf %11, %13 : vector<8x512xf32>
    %cst_11 = arith.constant 0.000000e+00 : f32
    %15 = vector.broadcast %cst_11 : f32 to vector<8x512xf32>
    %16 = arith.maximumf %14, %15 : vector<8x512xf32>
    %c0_12 = arith.constant 0 : index
    %c0_13 = arith.constant 0 : index
    %17 = vector.load %arg6[%c0_12, %c0_13] : memref<1x512xbf16, #tpu.memory_space<vmem>>, vector<1x512xbf16>
    %18 = arith.extf %17 : vector<1x512xbf16> to vector<1x512xf32>
    %19 = vector.broadcast %18 : vector<1x512xf32> to vector<8x512xf32>
    %20 = arith.mulf %16, %19 : vector<8x512xf32>
    %cst_14 = arith.constant dense<0.000000e+00> : vector<8xf32>
    %21 = vector.multi_reduction <add>, %20, %cst_14 [1] : vector<8x512xf32> to vector<8xf32>
    %22 = vector.shape_cast %21 : vector<8xf32> to vector<8x1xf32>
    %c0_15 = arith.constant 0 : index
    %c0_16 = arith.constant 0 : index
    %23 = memref.load %arg7[%c0_15, %c0_16] : memref<1x1xf32, #tpu.memory_space<smem>>
    %24 = vector.broadcast %23 : f32 to vector<8x1xf32>
    %25 = arith.addf %22, %24 : vector<8x1xf32>
    %c0_17 = arith.constant 0 : index
    %c0_18 = arith.constant 0 : index
    %26 = vector.load %arg8[%c0_17, %c0_18] : memref<8x1xf32, #tpu.memory_space<vmem>>, vector<8x1xf32>
    tpu.vector_store %arg8[%c0_17, %c0_18], %25 {strides = array<i32>} : memref<8x1xf32, #tpu.memory_space<vmem>>, vector<8x1xf32>,
    return
  }
  func.func @transform_0(%arg0: i32) -> (i32, i32) {
    %c0_i32 = arith.constant 0 : i32
    %c0_i32_0 = arith.constant 0 : i32
    return %arg0, %c0_i32 : i32, i32
  }
  func.func @transform_1(%arg0: i32) -> (i32, i32) {
    %c0_i32 = arith.constant 0 : i32
    %c0_i32_0 = arith.constant 0 : i32
    %c0_i32_1 = arith.constant 0 : i32
    return %c0_i32, %c0_i32_0 : i32, i32
  }
  func.func @transform_2(%arg0: i32) -> (i32, i32) {
    %c0_i32 = arith.constant 0 : i32
    %c0_i32_0 = arith.constant 0 : i32
    %c0_i32_1 = arith.constant 0 : i32
    return %c0_i32, %c0_i32_0 : i32, i32
  }
  func.func @transform_3(%arg0: i32) -> (i32, i32) {
    %c0_i32 = arith.constant 0 : i32
    %c0_i32_0 = arith.constant 0 : i32
    %c0_i32_1 = arith.constant 0 : i32
    return %c0_i32, %c0_i32_0 : i32, i32
  }
  func.func @transform_4(%arg0: i32) -> (i32, i32) {
    %c0_i32 = arith.constant 0 : i32
    %c0_i32_0 = arith.constant 0 : i32
    %c0_i32_1 = arith.constant 0 : i32
    return %c0_i32, %c0_i32_0 : i32, i32
  }
  func.func @transform_5(%arg0: i32) -> (i32, i32) {
    %c0_i32 = arith.constant 0 : i32
    %c0_i32_0 = arith.constant 0 : i32
    %c0_i32_1 = arith.constant 0 : i32
    return %c0_i32, %c0_i32_0 : i32, i32
  }
  func.func @transform_6(%arg0: i32) -> (i32, i32) {
    %c0_i32 = arith.constant 0 : i32
    %c0_i32_0 = arith.constant 0 : i32
    %c0_i32_1 = arith.constant 0 : i32
    return %c0_i32, %c0_i32_0 : i32, i32
  }
  func.func @transform_7(%arg0: i32) -> (i32, i32) {
    %c0_i32 = arith.constant 0 : i32
    %c0_i32_0 = arith.constant 0 : i32
    return %arg0, %c0_i32 : i32, i32
  }
}

</mosaic_0001>

<llo_original>
// kernel: tpu_custom_call.1
$region0: #{tpu_custom_call.1}
  #allocation0 [shape = 'u32[]', space=smem, size = 0x4, offset = 0x4, fixed_abs, tag = 'smem constant byte address 0x4 - core index']
  #allocation1 [shape = 'u32[144,128]{1,0:T(1,128)}', space=vmem, size = 0x12000, scoped, tag = 'internal scratch']
  #allocation2 [shape = 'f32[1,1]{1,0:T(1,128)S(6)}', space=smem, size = 0x200, scoped, tag = 'scoped memory for tpu_custom_call.1']
  %s0 = inlined_call_operand.hbm [shape: f32[8,24], index: 0, kind: input, shape index: {}]
  %s1 = inlined_call_operand.hbm [shape: bf16[24,512], index: 1, kind: input, shape index: {}]
  %s2 = inlined_call_operand.vmem [shape: f32[1,512], index: 2, kind: input, shape index: {}]
  %s3 = inlined_call_operand.hbm [shape: bf16[512,512], index: 3, kind: input, shape index: {}]
  %s4 = inlined_call_operand.vmem [shape: f32[1,512], index: 4, kind: input, shape index: {}]
  %s5 = inlined_call_operand.vmem [shape: bf16[1,512], index: 5, kind: input, shape index: {}]
  %s6 = inlined_call_operand.<no memory space> [shape: f32[1,1], index: 6, kind: input, shape index: {}]
  %s7 = inlined_call_operand.vmem [shape: f32[8,1], index: 7, kind: output, shape index: {}]
  %s8 = sld [smem:[#allocation0]]
  $region50: #{tpu_custom_call.1} parent=0
    _
  %s10 = ssub.s32 1, %s8
  %s11 = scalar_select 0, %s10, %s8
  %12 = sst [smem:[#allocation2]] %s6
  $region1: #{tpu_custom_call.1} parent=0
    #allocation3 [shape = 'u8[4096]{0}', space=vmem, size = 0x1000, scoped, tag = 'input window, operand 0, single buffered']
    #allocation4 [shape = 's32[1]{0}', space=sflag, size = 0x4, scoped, tag = 'scoped memory for tpu_custom_call.1']
    #allocation5 [shape = 'u8[24576]{0}', space=vmem, size = 0x6000, scoped, tag = 'input window, operand 1, single buffered']
    #allocation6 [shape = 's32[1]{0}', space=sflag, size = 0x4, scoped, tag = 'scoped memory for tpu_custom_call.1']
    #allocation7 [shape = 'u8[524288]{0}', space=vmem, size = 0x80000, scoped, tag = 'input window, operand 3, single buffered']
    %13 = vsyncpa [#allocation4], 0
    %14 = vsyncpa [#allocation6], 0
    // Predicated region
    $region2: #{tpu_custom_call.1} parent=1 // pred_check
      _
    $region3: #{tpu_custom_call.1} parent=1 // pred_check_branch
      %16 = sbr.rel (0) target = $region5
    $region4: #{tpu_custom_call.1} parent=1 // pred_region
      %s18 = ssub.s32 128, 128
      %19 = vsyncadd [#allocation4], %s18
      %s21 = sshll.u32 [#allocation3], 4
      %s22 = int_to_ptr.vmem [resolvable:$true] %s21
      %24 = dma.hbm_to_vmem [thread:$0]  %s0, 128, %s22, [#allocation4]
    $region5: #{tpu_custom_call.1} parent=1 // pred_fallthru
      _
    // Predicated region
    $region6: #{tpu_custom_call.1} parent=1 // pred_check
      _
    $region7: #{tpu_custom_call.1} parent=1 // pred_check_branch
      %26 = sbr.rel (0) target = $region9
    $region8: #{tpu_custom_call.1} parent=1 // pred_region
      %s28 = ssub.s32 768, 768
      %29 = vsyncadd [#allocation6], %s28
      %s30 = sshll.u32 [#allocation5], 4
      %s31 = int_to_ptr.vmem [resolvable:$true] %s30
      %36 = dma.hbm_to_vmem [thread:$0]  %s1, 768, %s31, [#allocation6], 256, 256, 16
    $region9: #{tpu_custom_call.1} parent=1 // pred_fallthru
      _
    // Predicated region
    $region10: #{tpu_custom_call.1} parent=1 // pred_check
      _
    $region11: #{tpu_custom_call.1} parent=1 // pred_check_branch
      %38 = sbr.rel (0) target = $region13
    $region12: #{tpu_custom_call.1} parent=1 // pred_region
      _
    $region13: #{tpu_custom_call.1} parent=1 // pred_fallthru
      _
    // Predicated region
    $region14: #{tpu_custom_call.1} parent=1 // pred_check
      _
    $region15: #{tpu_custom_call.1} parent=1 // pred_check_branch
      %40 = sbr.rel (0) target = $region17
    $region16: #{tpu_custom_call.1} parent=1 // pred_region
      %s42 = ssub.s32 16384, 16384
      %43 = vsyncadd [#allocation6], %s42
      %s44 = sshll.u32 [#allocation7], 4
      %s45 = int_to_ptr.vmem [resolvable:$true] %s44
      %50 = dma.hbm_to_vmem [thread:$0]  %s3, 16384, %s45, [#allocation6], 256, 256, 16
    $region17: #{tpu_custom_call.1} parent=1 // pred_fallthru
      _
    // Predicated region
    $region18: #{tpu_custom_call.1} parent=1 // pred_check
      _
    $region19: #{tpu_custom_call.1} parent=1 // pred_check_branch
      %52 = sbr.rel (0) target = $region21
    $region20: #{tpu_custom_call.1} parent=1 // pred_region
      _
    $region21: #{tpu_custom_call.1} parent=1 // pred_fallthru
      _
    // Predicated region
    $region22: #{tpu_custom_call.1} parent=1 // pred_check
      _
    $region23: #{tpu_custom_call.1} parent=1 // pred_check_branch
      %54 = sbr.rel (0) target = $region25
    $region24: #{tpu_custom_call.1} parent=1 // pred_region
      _
    $region25: #{tpu_custom_call.1} parent=1 // pred_fallthru
      _
    // Predicated region
    $region26: #{tpu_custom_call.1} parent=1 // pred_check
      _
    $region27: #{tpu_custom_call.1} parent=1 // pred_check_branch
      %56 = sbr.rel (0) target = $region29
    $region28: #{tpu_custom_call.1} parent=1 // pred_region
      _
    $region29: #{tpu_custom_call.1} parent=1 // pred_fallthru
      _
    // Predicated region
    $region30: #{tpu_custom_call.1} parent=1 // pred_check
      _
    $region31: #{tpu_custom_call.1} parent=1 // pred_check_branch
      %58 = sbr.rel (0) target = $region33
    $region32: #{tpu_custom_call.1} parent=1 // pred_region
      %59 = dma.done [#allocation4], 128
    $region33: #{tpu_custom_call.1} parent=1 // pred_fallthru
      _
    // Predicated region
    $region34: #{tpu_custom_call.1} parent=1 // pred_check
      _
    $region35: #{tpu_custom_call.1} parent=1 // pred_check_branch
      %61 = sbr.rel (0) target = $region37
    $region36: #{tpu_custom_call.1} parent=1 // pred_region
      %62 = dma.done [#allocation6], 768
    $region37: #{tpu_custom_call.1} parent=1 // pred_fallthru
      _
    // Predicated region
    $region38: #{tpu_custom_call.1} parent=1 // pred_check
      _
    $region39: #{tpu_custom_call.1} parent=1 // pred_check_branch
      %64 = sbr.rel (0) target = $region41
    $region40: #{tpu_custom_call.1} parent=1 // pred_region
      %65 = dma.done [#allocation6], 16384
    $region41: #{tpu_custom_call.1} parent=1 // pred_fallthru
      _
    %v67 = vld [vmem:[#allocation3] sm:$0xff]
    %v68 = vpack.c.bf16 %v67, %v67
    %v69 = vld [vmem:[#allocation5] sm:$0xff]
    %v70 = vld [vmem:[#allocation5 + $0x8] sm:$0xff]
    %v71 = vld [vmem:[#allocation5 + $0x10] sm:$0xff]
    %v72 = vld [vmem:[#allocation5 + $0x18] sm:$0xff]
    %v73 = vld [vmem:[#allocation5 + $0x20] sm:$0xff]
    %v74 = vld [vmem:[#allocation5 + $0x28] sm:$0xff]
    %v75 = vld [vmem:[%s2] sm:$0xf]
    %v77 = vlaneseq
    %v78 = vshrl.u32 %v77, 7
    %v79 = vsub.s32 0, %v78
    %v80 = vrot.slane %v75, %v79
    %v81 = vlaneseq
    %v82 = vshrl.u32 %v81, 7
    %v83 = vsub.s32 1, %v82
    %v84 = vrot.slane %v75, %v83
    %v85 = vlaneseq
    %v86 = vshrl.u32 %v85, 7
    %v87 = vsub.s32 2, %v86
    %v88 = vrot.slane %v75, %v87
    %v89 = vlaneseq
    %v90 = vshrl.u32 %v89, 7
    %v91 = vsub.s32 3, %v90
    %v92 = vrot.slane %v75, %v91
    %v103 = vunpack.c.l.b16 %v69
    %v104 = vunpack.c.h.b16 %v69
    %v105 = vunpack.c.l.b16 %v70
    %v106 = vunpack.c.h.b16 %v70
    %v107 = vunpack.c.l.b16 %v71
    %v108 = vunpack.c.h.b16 %v71
    %v109 = vunpack.c.l.b16 %v72
    %v110 = vunpack.c.h.b16 %v72
    %v111 = vunpack.c.l.b16 %v73
    %v112 = vunpack.c.h.b16 %v73
    %v113 = vunpack.c.l.b16 %v74
    %v114 = vunpack.c.h.b16 %v74
    %v115 = vpack.c.b16 %v107, %v103
    %v116 = vpack.c.b16 %v108, %v104
    %v117 = vpack.c.b16 %v109, %v105
    %v118 = vpack.c.b16 %v110, %v106
    %v119 = vpack.c.b16 %v111, %v111
    %v120 = vpack.c.b16 %v112, %v112
    %v121 = vpack.c.b16 %v113, %v113
    %v122 = vpack.c.b16 %v114, %v114
    %vm127 = vcmask 195584
    %v129 = vsel %vm127, %v68, 0
    %vm131 = vcmask 1043456
    %v133 = vsel %vm131, %v119, 0
    %v136 = vsel %vm131, %v120, 0
    %v139 = vsel %vm131, %v121, 0
    %v142 = vsel %vm131, %v122, 0
    %144 = vmatprep.subr.bf16.mxu0 %v116
    %145 = vmatpush1.bf16.msra.mxu0 %v115
    %146 = vmatprep.subr.bf16.mxu0 %v136
    %147 = vmatpush1.bf16.msra.mxu0 %v133
    %148 = vmatprep.subr.bf16.mxu0 0
    %149 = vmatpush1.bf16.msra.mxu0 0
    %150 = vmatprep.subr.bf16.mxu0 0
    %151 = vmatpush1.bf16.msra.mxu0 0
    %152 = vmatprep.subr.bf16.mxu0 0
    %153 = vmatpush1.bf16.msra.mxu0 0
    %154 = vmatprep.subr.bf16.mxu0 0
    %155 = vmatpush1.bf16.msra.mxu0 0
    %156 = vmatprep.subr.bf16.mxu0 0
    %157 = vmatpush1.bf16.msra.mxu0 0
    %158 = vmatprep.subr.bf16.mxu0 0
    %159 = vmatpush1.bf16.msra.mxu0 0
    %160 = vmatprep.subr.bf16.mxu0 0
    %161 = vmatpush1.bf16.msra.mxu0 0
    %162 = vmatprep.subr.bf16.mxu0 0
    %163 = vmatpush1.bf16.msra.mxu0 0
    %164 = vmatprep.subr.bf16.mxu0 0
    %165 = vmatpush1.bf16.msra.mxu0 0
    %166 = vmatprep.subr.bf16.mxu0 0
    %167 = vmatpush1.bf16.msra.mxu0 0
    %168 = vmatprep.subr.bf16.mxu0 0
    %169 = vmatpush1.bf16.msra.mxu0 0
    %170 = vmatprep.subr.bf16.mxu0 0
    %171 = vmatpush1.bf16.msra.mxu0 0
    %172 = vmatprep.subr.bf16.mxu0 0
    %173 = vmatpush1.bf16.msra.mxu0 0
    %174 = vmatprep.subr.bf16.mxu0 0
    %175 = vmatpush1.bf16.msra.mxu0 0
    %176 = vmatprep.mubr.bf16.mxu0 0
    %177 = vmatmul.mubr.bf16.gmra.mrb[0].mxu0 %v129
    %v178 = vpop.f32.mrb[0].mxu0
    %v179 = vadd.f32 %v80, %v178
    %v180 = vpop.f32.mrb[0].mxu0
    %v181 = vadd.f32 %v84, %v180
    %v182 = vpop.f32.mrb[0].mxu0
    %v183 = vpop.f32.mrb[0].mxu0
    %184 = vdwg.mxu0
    %185 = vmatprep.subr.bf16.mxu0 %v118
    %186 = vmatpush1.bf16.msra.mxu0 %v117
    %187 = vmatprep.subr.bf16.mxu0 %v142
    %188 = vmatpush1.bf16.msra.mxu0 %v139
    %189 = vmatprep.subr.bf16.mxu0 0
    %190 = vmatpush1.bf16.msra.mxu0 0
    %191 = vmatprep.subr.bf16.mxu0 0
    %192 = vmatpush1.bf16.msra.mxu0 0
    %193 = vmatprep.subr.bf16.mxu0 0
    %194 = vmatpush1.bf16.msra.mxu0 0
    %195 = vmatprep.subr.bf16.mxu0 0
    %196 = vmatpush1.bf16.msra.mxu0 0
    %197 = vmatprep.subr.bf16.mxu0 0
    %198 = vmatpush1.bf16.msra.mxu0 0
    %199 = vmatprep.subr.bf16.mxu0 0
    %200 = vmatpush1.bf16.msra.mxu0 0
    %201 = vmatprep.subr.bf16.mxu0 0
    %202 = vmatpush1.bf16.msra.mxu0 0
    %203 = vmatprep.subr.bf16.mxu0 0
    %204 = vmatpush1.bf16.msra.mxu0 0
    %205 = vmatprep.subr.bf16.mxu0 0
    %206 = vmatpush1.bf16.msra.mxu0 0
    %207 = vmatprep.subr.bf16.mxu0 0
    %208 = vmatpush1.bf16.msra.mxu0 0
    %209 = vmatprep.subr.bf16.mxu0 0
    %210 = vmatpush1.bf16.msra.mxu0 0
    %211 = vmatprep.subr.bf16.mxu0 0
    %212 = vmatpush1.bf16.msra.mxu0 0
    %213 = vmatprep.subr.bf16.mxu0 0
    %214 = vmatpush1.bf16.msra.mxu0 0
    %215 = vmatprep.subr.bf16.mxu0 0
    %216 = vmatpush1.bf16.msra.mxu0 0
    %217 = vmatprep.mubr.bf16.mxu0 0
    %218 = vmatmul.mubr.bf16.gmra.mrb[0].mxu0 %v129
    %v219 = vpop.f32.mrb[0].mxu0
    %v220 = vadd.f32 %v88, %v219
    %v221 = vpop.f32.mrb[0].mxu0
    %v222 = vadd.f32 %v92, %v221
    %v223 = vpop.f32.mrb[0].mxu0
    %v224 = vpop.f32.mrb[0].mxu0
    %225 = vdwg.mxu0
    %v226 = vmax.f32 %v179, 0.0
    %v227 = vmax.f32 %v181, 0.0
    %v228 = vmax.f32 %v220, 0.0
    %v229 = vmax.f32 %v222, 0.0
    %v230 = vpack.c.bf16 %v226, %v226
    %v231 = vpack.c.bf16 %v227, %v227
    %v232 = vpack.c.bf16 %v228, %v228
    %v233 = vpack.c.bf16 %v229, %v229
    %v234 = vld [vmem:[#allocation7] sm:$0xff]
    %v235 = vld [vmem:[#allocation7 + $0x8] sm:$0xff]
    %v236 = vld [vmem:[#allocation7 + $0x10] sm:$0xff]
    %v237 = vld [vmem:[#allocation7 + $0x18] sm:$0xff]
    %v238 = vld [vmem:[#allocation7 + $0x20] sm:$0xff]
    %v239 = vld [vmem:[#allocation7 + $0x28] sm:$0xff]
    %v240 = vld [vmem:[#allocation7 + $0x30] sm:$0xff]
    %v241 = vld [vmem:[#allocation7 + $0x38] sm:$0xff]
    %v242 = vld [vmem:[#allocation7 + $0x40] sm:$0xff]
    %v243 = vld [vmem:[#allocation7 + $0x48] sm:$0xff]
    %v244 = vld [vmem:[#allocation7 + $0x50] sm:$0xff]
    %v245 = vld [vmem:[#allocation7 + $0x58] sm:$0xff]
    %v246 = vld [vmem:[#allocation7 + $0x60] sm:$0xff]
    %v247 = vld [vmem:[#allocation7 + $0x68] sm:$0xff]
    %v248 = vld [vmem:[#allocation7 + $0x70] sm:$0xff]
    %v249 = vld [vmem:[#allocation7 + $0x78] sm:$0xff]
    %v250 = vld [vmem:[#allocation7 + $0x80] sm:$0xff]
    %v251 = vld [vmem:[#allocation7 + $0x88] sm:$0xff]
    %v252 = vld [vmem:[#allocation7 + $0x90] sm:$0xff]
    %v253 = vld [vmem:[#allocation7 + $0x98] sm:$0xff]
    %v254 = vld [vmem:[#allocation7 + $0xa0] sm:$0xff]
    %v255 = vld [vmem:[#allocation7 + $0xa8] sm:$0xff]
    %v256 = vld [vmem:[#allocation7 + $0xb0] sm:$0xff]
    %v257 = vld [vmem:[#allocation7 + $0xb8] sm:$0xff]
    %v258 = vld [vmem:[#allocation7 + $0xc0] sm:$0xff]
    %v259 = vld [vmem:[#allocation7 + $0xc8] sm:$0xff]
    %v260 = vld [vmem:[#allocation7 + $0xd0] sm:$0xff]
    %v261 = vld [vmem:[#allocation7 + $0xd8] sm:$0xff]
    %v262 = vld [vmem:[#allocation7 + $0xe0] sm:$0xff]
    %v263 = vld [vmem:[#allocation7 + $0xe8] sm:$0xff]
    %v264 = vld [vmem:[#allocation7 + $0xf0] sm:$0xff]
    %v265 = vld [vmem:[#allocation7 + $0xf8] sm:$0xff]
    %v266 = vld [vmem:[#allocation7 + $0x100] sm:$0xff]
    %v267 = vld [vmem:[#allocation7 + $0x108] sm:$0xff]
    %v268 = vld [vmem:[#allocation7 + $0x110] sm:$0xff]
    %v269 = vld [vmem:[#allocation7 + $0x118] sm:$0xff]
    %v270 = vld [vmem:[#allocation7 + $0x120] sm:$0xff]
    %v271 = vld [vmem:[#allocation7 + $0x128] sm:$0xff]
    %v272 = vld [vmem:[#allocation7 + $0x130] sm:$0xff]
    %v273 = vld [vmem:[#allocation7 + $0x138] sm:$0xff]
    %v274 = vld [vmem:[#allocation7 + $0x140] sm:$0xff]
    %v275 = vld [vmem:[#allocation7 + $0x148] sm:$0xff]
    %v276 = vld [vmem:[#allocation7 + $0x150] sm:$0xff]
    %v277 = vld [vmem:[#allocation7 + $0x158] sm:$0xff]
    %v278 = vld [vmem:[#allocation7 + $0x160] sm:$0xff]
    %v279 = vld [vmem:[#allocation7 + $0x168] sm:$0xff]
    %v280 = vld [vmem:[#allocation7 + $0x170] sm:$0xff]
    %v281 = vld [vmem:[#allocation7 + $0x178] sm:$0xff]
    %v282 = vld [vmem:[#allocation7 + $0x180] sm:$0xff]
    %v283 = vld [vmem:[#allocation7 + $0x188] sm:$0xff]
    %v284 = vld [vmem:[#allocation7 + $0x190] sm:$0xff]
    %v285 = vld [vmem:[#allocation7 + $0x198] sm:$0xff]
    %v286 = vld [vmem:[#allocation7 + $0x1a0] sm:$0xff]
    %v287 = vld [vmem:[#allocation7 + $0x1a8] sm:$0xff]
    %v288 = vld [vmem:[#allocation7 + $0x1b0] sm:$0xff]
    %v289 = vld [vmem:[#allocation7 + $0x1b8] sm:$0xff]
    %v290 = vld [vmem:[#allocation7 + $0x1c0] sm:$0xff]
    %v291 = vld [vmem:[#allocation7 + $0x1c8] sm:$0xff]
    %v292 = vld [vmem:[#allocation7 + $0x1d0] sm:$0xff]
    %v293 = vld [vmem:[#allocation7 + $0x1d8] sm:$0xff]
    %v294 = vld [vmem:[#allocation7 + $0x1e0] sm:$0xff]
    %v295 = vld [vmem:[#allocation7 + $0x1e8] sm:$0xff]
    %v296 = vld [vmem:[#allocation7 + $0x1f0] sm:$0xff]
    %v297 = vld [vmem:[#allocation7 + $0x1f8] sm:$0xff]
    %v298 = vld [vmem:[#allocation7 + $0x200] sm:$0xff]
    %v299 = vld [vmem:[#allocation7 + $0x208] sm:$0xff]
    %v300 = vld [vmem:[#allocation7 + $0x210] sm:$0xff]
    %v301 = vld [vmem:[#allocation7 + $0x218] sm:$0xff]
    %v302 = vld [vmem:[#allocation7 + $0x220] sm:$0xff]
    %v303 = vld [vmem:[#allocation7 + $0x228] sm:$0xff]
    %v304 = vld [vmem:[#allocation7 + $0x230] sm:$0xff]
    %v305 = vld [vmem:[#allocation7 + $0x238] sm:$0xff]
    %v306 = vld [vmem:[#allocation7 + $0x240] sm:$0xff]
    %v307 = vld [vmem:[#allocation7 + $0x248] sm:$0xff]
    %v308 = vld [vmem:[#allocation7 + $0x250] sm:$0xff]
    %v309 = vld [vmem:[#allocation7 + $0x258] sm:$0xff]
    %v310 = vld [vmem:[#allocation7 + $0x260] sm:$0xff]
    %v311 = vld [vmem:[#allocation7 + $0x268] sm:$0xff]
    %v312 = vld [vmem:[#allocation7 + $0x270] sm:$0xff]
    %v313 = vld [vmem:[#allocation7 + $0x278] sm:$0xff]
    %v314 = vld [vmem:[#allocation7 + $0x280] sm:$0xff]
    %v315 = vld [vmem:[#allocation7 + $0x288] sm:$0xff]
    %v316 = vld [vmem:[#allocation7 + $0x290] sm:$0xff]
    %v317 = vld [vmem:[#allocation7 + $0x298] sm:$0xff]
    %v318 = vld [vmem:[#allocation7 + $0x2a0] sm:$0xff]
    %v319 = vld [vmem:[#allocation7 + $0x2a8] sm:$0xff]
    %v320 = vld [vmem:[#allocation7 + $0x2b0] sm:$0xff]
    %v321 = vld [vmem:[#allocation7 + $0x2b8] sm:$0xff]
    %v322 = vld [vmem:[#allocation7 + $0x2c0] sm:$0xff]
    %v323 = vld [vmem:[#allocation7 + $0x2c8] sm:$0xff]
    %v324 = vld [vmem:[#allocation7 + $0x2d0] sm:$0xff]
    %v325 = vld [vmem:[#allocation7 + $0x2d8] sm:$0xff]
    %v326 = vld [vmem:[#allocation7 + $0x2e0] sm:$0xff]
    %v327 = vld [vmem:[#allocation7 + $0x2e8] sm:$0xff]
    %v328 = vld [vmem:[#allocation7 + $0x2f0] sm:$0xff]
    %v329 = vld [vmem:[#allocation7 + $0x2f8] sm:$0xff]
    %v330 = vld [vmem:[#allocation7 + $0x300] sm:$0xff]
    %v331 = vld [vmem:[#allocation7 + $0x308] sm:$0xff]
    %v332 = vld [vmem:[#allocation7 + $0x310] sm:$0xff]
    %v333 = vld [vmem:[#allocation7 + $0x318] sm:$0xff]
    %v334 = vld [vmem:[#allocation7 + $0x320] sm:$0xff]
    %v335 = vld [vmem:[#allocation7 + $0x328] sm:$0xff]
    %v336 = vld [vmem:[#allocation7 + $0x330] sm:$0xff]
    %v337 = vld [vmem:[#allocation7 + $0x338] sm:$0xff]
    %v338 = vld [vmem:[#allocation7 + $0x340] sm:$0xff]
    %v339 = vld [vmem:[#allocation7 + $0x348] sm:$0xff]
    %v340 = vld [vmem:[#allocation7 + $0x350] sm:$0xff]
    %v341 = vld [vmem:[#allocation7 + $0x358] sm:$0xff]
    %v342 = vld [vmem:[#allocation7 + $0x360] sm:$0xff]
    %v343 = vld [vmem:[#allocation7 + $0x368] sm:$0xff]
    %v344 = vld [vmem:[#allocation7 + $0x370] sm:$0xff]
    %v345 = vld [vmem:[#allocation7 + $0x378] sm:$0xff]
    %v346 = vld [vmem:[#allocation7 + $0x380] sm:$0xff]
    %v347 = vld [vmem:[#allocation7 + $0x388] sm:$0xff]
    %v348 = vld [vmem:[#allocation7 + $0x390] sm:$0xff]
    %v349 = vld [vmem:[#allocation7 + $0x398] sm:$0xff]
    %v350 = vld [vmem:[#allocation7 + $0x3a0] sm:$0xff]
    %v351 = vld [vmem:[#allocation7 + $0x3a8] sm:$0xff]
    %v352 = vld [vmem:[#allocation7 + $0x3b0] sm:$0xff]
    %v353 = vld [vmem:[#allocation7 + $0x3b8] sm:$0xff]
    %v354 = vld [vmem:[#allocation7 + $0x3c0] sm:$0xff]
    %v355 = vld [vmem:[#allocation7 + $0x3c8] sm:$0xff]
    %v356 = vld [vmem:[#allocation7 + $0x3d0] sm:$0xff]
    %v357 = vld [vmem:[#allocation7 + $0x3d8] sm:$0xff]
    %v358 = vld [vmem:[#allocation7 + $0x3e0] sm:$0xff]
    %v359 = vld [vmem:[#allocation7 + $0x3e8] sm:$0xff]
    %v360 = vld [vmem:[#allocation7 + $0x3f0] sm:$0xff]
    %v361 = vld [vmem:[#allocation7 + $0x3f8] sm:$0xff]
    %v362 = vld [vmem:[%s4] sm:$0xf]
    %v364 = vlaneseq
    %v365 = vshrl.u32 %v364, 7
    %v366 = vsub.s32 0, %v365
    %v367 = vrot.slane %v362, %v366
    %v368 = vlaneseq
    %v369 = vshrl.u32 %v368, 7
    %v370 = vsub.s32 1, %v369
    %v371 = vrot.slane %v362, %v370
    %v372 = vlaneseq
    %v373 = vshrl.u32 %v372, 7
    %v374 = vsub.s32 2, %v373
    %v375 = vrot.slane %v362, %v374
    %v376 = vlaneseq
    %v377 = vshrl.u32 %v376, 7
    %v378 = vsub.s32 3, %v377
    %v379 = vrot.slane %v362, %v378
    %v512 = vunpack.c.l.b16 %v234
    %v513 = vunpack.c.h.b16 %v234
    %v514 = vunpack.c.l.b16 %v235
    %v515 = vunpack.c.h.b16 %v235
    %v516 = vunpack.c.l.b16 %v236
    %v517 = vunpack.c.h.b16 %v236
    %v518 = vunpack.c.l.b16 %v237
    %v519 = vunpack.c.h.b16 %v237
    %v520 = vunpack.c.l.b16 %v238
    %v521 = vunpack.c.h.b16 %v238
    %v522 = vunpack.c.l.b16 %v239
    %v523 = vunpack.c.h.b16 %v239
    %v524 = vunpack.c.l.b16 %v240
    %v525 = vunpack.c.h.b16 %v240
    %v526 = vunpack.c.l.b16 %v241
    %v527 = vunpack.c.h.b16 %v241
    %v528 = vunpack.c.l.b16 %v242
    %v529 = vunpack.c.h.b16 %v242
    %v530 = vunpack.c.l.b16 %v243
    %v531 = vunpack.c.h.b16 %v243
    %v532 = vunpack.c.l.b16 %v244
    %v533 = vunpack.c.h.b16 %v244
    %v534 = vunpack.c.l.b16 %v245
    %v535 = vunpack.c.h.b16 %v245
    %v536 = vunpack.c.l.b16 %v246
    %v537 = vunpack.c.h.b16 %v246
    %v538 = vunpack.c.l.b16 %v247
    %v539 = vunpack.c.h.b16 %v247
    %v540 = vunpack.c.l.b16 %v248
    %v541 = vunpack.c.h.b16 %v248
    %v542 = vunpack.c.l.b16 %v249
    %v543 = vunpack.c.h.b16 %v249
    %v544 = vunpack.c.l.b16 %v250
    %v545 = vunpack.c.h.b16 %v250
    %v546 = vunpack.c.l.b16 %v251
    %v547 = vunpack.c.h.b16 %v251
    %v548 = vunpack.c.l.b16 %v252
    %v549 = vunpack.c.h.b16 %v252
    %v550 = vunpack.c.l.b16 %v253
    %v551 = vunpack.c.h.b16 %v253
    %v552 = vunpack.c.l.b16 %v254
    %v553 = vunpack.c.h.b16 %v254
    %v554 = vunpack.c.l.b16 %v255
    %v555 = vunpack.c.h.b16 %v255
    %v556 = vunpack.c.l.b16 %v256
    %v557 = vunpack.c.h.b16 %v256
    %v558 = vunpack.c.l.b16 %v257
    %v559 = vunpack.c.h.b16 %v257
    %v560 = vunpack.c.l.b16 %v258
    %v561 = vunpack.c.h.b16 %v258
    %v562 = vunpack.c.l.b16 %v259
    %v563 = vunpack.c.h.b16 %v259
    %v564 = vunpack.c.l.b16 %v260
    %v565 = vunpack.c.h.b16 %v260
    %v566 = vunpack.c.l.b16 %v261
    %v567 = vunpack.c.h.b16 %v261
    %v568 = vunpack.c.l.b16 %v262
    %v569 = vunpack.c.h.b16 %v262
    %v570 = vunpack.c.l.b16 %v263
    %v571 = vunpack.c.h.b16 %v263
    %v572 = vunpack.c.l.b16 %v264
    %v573 = vunpack.c.h.b16 %v264
    %v574 = vunpack.c.l.b16 %v265
    %v575 = vunpack.c.h.b16 %v265
    %v576 = vunpack.c.l.b16 %v266
    %v577 = vunpack.c.h.b16 %v266
    %v578 = vunpack.c.l.b16 %v267
    %v579 = vunpack.c.h.b16 %v267
    %v580 = vunpack.c.l.b16 %v268
    %v581 = vunpack.c.h.b16 %v268
    %v582 = vunpack.c.l.b16 %v269
    %v583 = vunpack.c.h.b16 %v269
    %v584 = vunpack.c.l.b16 %v270
    %v585 = vunpack.c.h.b16 %v270
    %v586 = vunpack.c.l.b16 %v271
    %v587 = vunpack.c.h.b16 %v271
    %v588 = vunpack.c.l.b16 %v272
    %v589 = vunpack.c.h.b16 %v272
    %v590 = vunpack.c.l.b16 %v273
    %v591 = vunpack.c.h.b16 %v273
    %v592 = vunpack.c.l.b16 %v274
    %v593 = vunpack.c.h.b16 %v274
    %v594 = vunpack.c.l.b16 %v275
    %v595 = vunpack.c.h.b16 %v275
    %v596 = vunpack.c.l.b16 %v276
    %v597 = vunpack.c.h.b16 %v276
    %v598 = vunpack.c.l.b16 %v277
    %v599 = vunpack.c.h.b16 %v277
    %v600 = vunpack.c.l.b16 %v278
    %v601 = vunpack.c.h.b16 %v278
    %v602 = vunpack.c.l.b16 %v279
    %v603 = vunpack.c.h.b16 %v279
    %v604 = vunpack.c.l.b16 %v280
    %v605 = vunpack.c.h.b16 %v280
    %v606 = vunpack.c.l.b16 %v281
    %v607 = vunpack.c.h.b16 %v281
    %v608 = vunpack.c.l.b16 %v282
    %v609 = vunpack.c.h.b16 %v282
    %v610 = vunpack.c.l.b16 %v283
    %v611 = vunpack.c.h.b16 %v283
    %v612 = vunpack.c.l.b16 %v284
    %v613 = vunpack.c.h.b16 %v284
    %v614 = vunpack.c.l.b16 %v285
    %v615 = vunpack.c.h.b16 %v285
    %v616 = vunpack.c.l.b16 %v286
    %v617 = vunpack.c.h.b16 %v286
    %v618 = vunpack.c.l.b16 %v287
    %v619 = vunpack.c.h.b16 %v287
    %v620 = vunpack.c.l.b16 %v288
    %v621 = vunpack.c.h.b16 %v288
    %v622 = vunpack.c.l.b16 %v289
    %v623 = vunpack.c.h.b16 %v289
    %v624 = vunpack.c.l.b16 %v290
    %v625 = vunpack.c.h.b16 %v290
    %v626 = vunpack.c.l.b16 %v291
    %v627 = vunpack.c.h.b16 %v291
    %v628 = vunpack.c.l.b16 %v292
    %v629 = vunpack.c.h.b16 %v292
    %v630 = vunpack.c.l.b16 %v293
    %v631 = vunpack.c.h.b16 %v293
    %v632 = vunpack.c.l.b16 %v294
    %v633 = vunpack.c.h.b16 %v294
    %v634 = vunpack.c.l.b16 %v295
    %v635 = vunpack.c.h.b16 %v295
    %v636 = vunpack.c.l.b16 %v296
    %v637 = vunpack.c.h.b16 %v296
    %v638 = vunpack.c.l.b16 %v297
    %v639 = vunpack.c.h.b16 %v297
    %v640 = vunpack.c.l.b16 %v298
    %v641 = vunpack.c.h.b16 %v298
    %v642 = vunpack.c.l.b16 %v299
    %v643 = vunpack.c.h.b16 %v299
    %v644 = vunpack.c.l.b16 %v300
    %v645 = vunpack.c.h.b16 %v300
    %v646 = vunpack.c.l.b16 %v301
    %v647 = vunpack.c.h.b16 %v301
    %v648 = vunpack.c.l.b16 %v302
    %v649 = vunpack.c.h.b16 %v302
    %v650 = vunpack.c.l.b16 %v303
    %v651 = vunpack.c.h.b16 %v303
    %v652 = vunpack.c.l.b16 %v304
    %v653 = vunpack.c.h.b16 %v304
    %v654 = vunpack.c.l.b16 %v305
    %v655 = vunpack.c.h.b16 %v305
    %v656 = vunpack.c.l.b16 %v306
    %v657 = vunpack.c.h.b16 %v306
    %v658 = vunpack.c.l.b16 %v307
    %v659 = vunpack.c.h.b16 %v307
    %v660 = vunpack.c.l.b16 %v308
    %v661 = vunpack.c.h.b16 %v308
    %v662 = vunpack.c.l.b16 %v309
    %v663 = vunpack.c.h.b16 %v309
    %v664 = vunpack.c.l.b16 %v310
    %v665 = vunpack.c.h.b16 %v310
    %v666 = vunpack.c.l.b16 %v311
    %v667 = vunpack.c.h.b16 %v311
    %v668 = vunpack.c.l.b16 %v312
    %v669 = vunpack.c.h.b16 %v312
    %v670 = vunpack.c.l.b16 %v313
    %v671 = vunpack.c.h.b16 %v313
    %v672 = vunpack.c.l.b16 %v314
    %v673 = vunpack.c.h.b16 %v314
    %v674 = vunpack.c.l.b16 %v315
    %v675 = vunpack.c.h.b16 %v315
    %v676 = vunpack.c.l.b16 %v316
    %v677 = vunpack.c.h.b16 %v316
    %v678 = vunpack.c.l.b16 %v317
    %v679 = vunpack.c.h.b16 %v317
    %v680 = vunpack.c.l.b16 %v318
    %v681 = vunpack.c.h.b16 %v318
    %v682 = vunpack.c.l.b16 %v319
    %v683 = vunpack.c.h.b16 %v319
    %v684 = vunpack.c.l.b16 %v320
    %v685 = vunpack.c.h.b16 %v320
    %v686 = vunpack.c.l.b16 %v321
    %v687 = vunpack.c.h.b16 %v321
    %v688 = vunpack.c.l.b16 %v322
    %v689 = vunpack.c.h.b16 %v322
    %v690 = vunpack.c.l.b16 %v323
    %v691 = vunpack.c.h.b16 %v323
    %v692 = vunpack.c.l.b16 %v324
    %v693 = vunpack.c.h.b16 %v324
    %v694 = vunpack.c.l.b16 %v325
    %v695 = vunpack.c.h.b16 %v325
    %v696 = vunpack.c.l.b16 %v326
    %v697 = vunpack.c.h.b16 %v326
    %v698 = vunpack.c.l.b16 %v327
    %v699 = vunpack.c.h.b16 %v327
    %v700 = vunpack.c.l.b16 %v328
    %v701 = vunpack.c.h.b16 %v328
    %v702 = vunpack.c.l.b16 %v329
    %v703 = vunpack.c.h.b16 %v329
    %v704 = vunpack.c.l.b16 %v330
    %v705 = vunpack.c.h.b16 %v330
    %v706 = vunpack.c.l.b16 %v331
    %v707 = vunpack.c.h.b16 %v331
    %v708 = vunpack.c.l.b16 %v332
    %v709 = vunpack.c.h.b16 %v332
    %v710 = vunpack.c.l.b16 %v333
    %v711 = vunpack.c.h.b16 %v333
    %v712 = vunpack.c.l.b16 %v334
    %v713 = vunpack.c.h.b16 %v334
    %v714 = vunpack.c.l.b16 %v335
    %v715 = vunpack.c.h.b16 %v335
    %v716 = vunpack.c.l.b16 %v336
    %v717 = vunpack.c.h.b16 %v336
    %v718 = vunpack.c.l.b16 %v337
    %v719 = vunpack.c.h.b16 %v337
    %v720 = vunpack.c.l.b16 %v338
    %v721 = vunpack.c.h.b16 %v338
    %v722 = vunpack.c.l.b16 %v339
    %v723 = vunpack.c.h.b16 %v339
    %v724 = vunpack.c.l.b16 %v340
    %v725 = vunpack.c.h.b16 %v340
    %v726 = vunpack.c.l.b16 %v341
    %v727 = vunpack.c.h.b16 %v341
    %v728 = vunpack.c.l.b16 %v342
    %v729 = vunpack.c.h.b16 %v342
    %v730 = vunpack.c.l.b16 %v343
    %v731 = vunpack.c.h.b16 %v343
    %v732 = vunpack.c.l.b16 %v344
    %v733 = vunpack.c.h.b16 %v344
    %v734 = vunpack.c.l.b16 %v345
    %v735 = vunpack.c.h.b16 %v345
    %v736 = vunpack.c.l.b16 %v346
    %v737 = vunpack.c.h.b16 %v346
    %v738 = vunpack.c.l.b16 %v347
    %v739 = vunpack.c.h.b16 %v347
    %v740 = vunpack.c.l.b16 %v348
    %v741 = vunpack.c.h.b16 %v348
    %v742 = vunpack.c.l.b16 %v349
    %v743 = vunpack.c.h.b16 %v349
    %v744 = vunpack.c.l.b16 %v350
    %v745 = vunpack.c.h.b16 %v350
    %v746 = vunpack.c.l.b16 %v351
    %v747 = vunpack.c.h.b16 %v351
    %v748 = vunpack.c.l.b16 %v352
    %v749 = vunpack.c.h.b16 %v352
    %v750 = vunpack.c.l.b16 %v353
    %v751 = vunpack.c.h.b16 %v353
    %v752 = vunpack.c.l.b16 %v354
    %v753 = vunpack.c.h.b16 %v354
    %v754 = vunpack.c.l.b16 %v355
    %v755 = vunpack.c.h.b16 %v355
    %v756 = vunpack.c.l.b16 %v356
    %v757 = vunpack.c.h.b16 %v356
    %v758 = vunpack.c.l.b16 %v357
    %v759 = vunpack.c.h.b16 %v357
    %v760 = vunpack.c.l.b16 %v358
    %v761 = vunpack.c.h.b16 %v358
    %v762 = vunpack.c.l.b16 %v359
    %v763 = vunpack.c.h.b16 %v359
    %v764 = vunpack.c.l.b16 %v360
    %v765 = vunpack.c.h.b16 %v360
    %v766 = vunpack.c.l.b16 %v361
    %v767 = vunpack.c.h.b16 %v361
    %v768 = vpack.c.b16 %v516, %v512
    %v769 = vpack.c.b16 %v517, %v513
    %v770 = vpack.c.b16 %v518, %v514
    %v771 = vpack.c.b16 %v519, %v515
    %v772 = vpack.c.b16 %v524, %v520
    %v773 = vpack.c.b16 %v525, %v521
    %v774 = vpack.c.b16 %v526, %v522
    %v775 = vpack.c.b16 %v527, %v523
    %v776 = vpack.c.b16 %v532, %v528
    %v777 = vpack.c.b16 %v533, %v529
    %v778 = vpack.c.b16 %v534, %v530
    %v779 = vpack.c.b16 %v535, %v531
    %v780 = vpack.c.b16 %v540, %v536
    %v781 = vpack.c.b16 %v541, %v537
    %v782 = vpack.c.b16 %v542, %v538
    %v783 = vpack.c.b16 %v543, %v539
    %v784 = vpack.c.b16 %v548, %v544
    %v785 = vpack.c.b16 %v549, %v545
    %v786 = vpack.c.b16 %v550, %v546
    %v787 = vpack.c.b16 %v551, %v547
    %v788 = vpack.c.b16 %v556, %v552
    %v789 = vpack.c.b16 %v557, %v553
    %v790 = vpack.c.b16 %v558, %v554
    %v791 = vpack.c.b16 %v559, %v555
    %v792 = vpack.c.b16 %v564, %v560
    %v793 = vpack.c.b16 %v565, %v561
    %v794 = vpack.c.b16 %v566, %v562
    %v795 = vpack.c.b16 %v567, %v563
    %v796 = vpack.c.b16 %v572, %v568
    %v797 = vpack.c.b16 %v573, %v569
    %v798 = vpack.c.b16 %v574, %v570
    %v799 = vpack.c.b16 %v575, %v571
    %v800 = vpack.c.b16 %v580, %v576
    %v801 = vpack.c.b16 %v581, %v577
    %v802 = vpack.c.b16 %v582, %v578
    %v803 = vpack.c.b16 %v583, %v579
    %v804 = vpack.c.b16 %v588, %v584
    %v805 = vpack.c.b16 %v589, %v585
    %v806 = vpack.c.b16 %v590, %v586
    %v807 = vpack.c.b16 %v591, %v587
    %v808 = vpack.c.b16 %v596, %v592
    %v809 = vpack.c.b16 %v597, %v593
    %v810 = vpack.c.b16 %v598, %v594
    %v811 = vpack.c.b16 %v599, %v595
    %v812 = vpack.c.b16 %v604, %v600
    %v813 = vpack.c.b16 %v605, %v601
    %v814 = vpack.c.b16 %v606, %v602
    %v815 = vpack.c.b16 %v607, %v603
    %v816 = vpack.c.b16 %v612, %v608
    %v817 = vpack.c.b16 %v613, %v609
    %v818 = vpack.c.b16 %v614, %v610
    %v819 = vpack.c.b16 %v615, %v611
    %v820 = vpack.c.b16 %v620, %v616
    %v821 = vpack.c.b16 %v621, %v617
    %v822 = vpack.c.b16 %v622, %v618
    %v823 = vpack.c.b16 %v623, %v619
    %v824 = vpack.c.b16 %v628, %v624
    %v825 = vpack.c.b16 %v629, %v625
    %v826 = vpack.c.b16 %v630, %v626
    %v827 = vpack.c.b16 %v631, %v627
    %v828 = vpack.c.b16 %v636, %v632
    %v829 = vpack.c.b16 %v637, %v633
    %v830 = vpack.c.b16 %v638, %v634
    %v831 = vpack.c.b16 %v639, %v635
    %v832 = vpack.c.b16 %v644, %v640
    %v833 = vpack.c.b16 %v645, %v641
    %v834 = vpack.c.b16 %v646, %v642
    %v835 = vpack.c.b16 %v647, %v643
    %v836 = vpack.c.b16 %v652, %v648
    %v837 = vpack.c.b16 %v653, %v649
    %v838 = vpack.c.b16 %v654, %v650
    %v839 = vpack.c.b16 %v655, %v651
    %v840 = vpack.c.b16 %v660, %v656
    %v841 = vpack.c.b16 %v661, %v657
    %v842 = vpack.c.b16 %v662, %v658
    %v843 = vpack.c.b16 %v663, %v659
    %v844 = vpack.c.b16 %v668, %v664
    %v845 = vpack.c.b16 %v669, %v665
    %v846 = vpack.c.b16 %v670, %v666
    %v847 = vpack.c.b16 %v671, %v667
    %v848 = vpack.c.b16 %v676, %v672
    %v849 = vpack.c.b16 %v677, %v673
    %v850 = vpack.c.b16 %v678, %v674
    %v851 = vpack.c.b16 %v679, %v675
    %v852 = vpack.c.b16 %v684, %v680
    %v853 = vpack.c.b16 %v685, %v681
    %v854 = vpack.c.b16 %v686, %v682
    %v855 = vpack.c.b16 %v687, %v683
    %v856 = vpack.c.b16 %v692, %v688
    %v857 = vpack.c.b16 %v693, %v689
    %v858 = vpack.c.b16 %v694, %v690
    %v859 = vpack.c.b16 %v695, %v691
    %v860 = vpack.c.b16 %v700, %v696
    %v861 = vpack.c.b16 %v701, %v697
    %v862 = vpack.c.b16 %v702, %v698
    %v863 = vpack.c.b16 %v703, %v699
    %v864 = vpack.c.b16 %v708, %v704
    %v865 = vpack.c.b16 %v709, %v705
    %v866 = vpack.c.b16 %v710, %v706
    %v867 = vpack.c.b16 %v711, %v707
    %v868 = vpack.c.b16 %v716, %v712
    %v869 = vpack.c.b16 %v717, %v713
    %v870 = vpack.c.b16 %v718, %v714
    %v871 = vpack.c.b16 %v719, %v715
    %v872 = vpack.c.b16 %v724, %v720
    %v873 = vpack.c.b16 %v725, %v721
    %v874 = vpack.c.b16 %v726, %v722
    %v875 = vpack.c.b16 %v727, %v723
    %v876 = vpack.c.b16 %v732, %v728
    %v877 = vpack.c.b16 %v733, %v729
    %v878 = vpack.c.b16 %v734, %v730
    %v879 = vpack.c.b16 %v735, %v731
    %v880 = vpack.c.b16 %v740, %v736
    %v881 = vpack.c.b16 %v741, %v737
    %v882 = vpack.c.b16 %v742, %v738
    %v883 = vpack.c.b16 %v743, %v739
    %v884 = vpack.c.b16 %v748, %v744
    %v885 = vpack.c.b16 %v749, %v745
    %v886 = vpack.c.b16 %v750, %v746
    %v887 = vpack.c.b16 %v751, %v747
    %v888 = vpack.c.b16 %v756, %v752
    %v889 = vpack.c.b16 %v757, %v753
    %v890 = vpack.c.b16 %v758, %v754
    %v891 = vpack.c.b16 %v759, %v755
    %v892 = vpack.c.b16 %v764, %v760
    %v893 = vpack.c.b16 %v765, %v761
    %v894 = vpack.c.b16 %v766, %v762
    %v895 = vpack.c.b16 %v767, %v763
    %1024 = vmatprep.subr.bf16.mxu0 %v769
    %1025 = vmatpush1.bf16.msra.mxu0 %v768
    %1026 = vmatprep.subr.bf16.mxu0 %v773
    %1027 = vmatpush1.bf16.msra.mxu0 %v772
    %1028 = vmatprep.subr.bf16.mxu0 %v777
    %1029 = vmatpush1.bf16.msra.mxu0 %v776
    %1030 = vmatprep.subr.bf16.mxu0 %v781
    %1031 = vmatpush1.bf16.msra.mxu0 %v780
    %1032 = vmatprep.subr.bf16.mxu0 %v785
    %1033 = vmatpush1.bf16.msra.mxu0 %v784
    %1034 = vmatprep.subr.bf16.mxu0 %v789
    %1035 = vmatpush1.bf16.msra.mxu0 %v788
    %1036 = vmatprep.subr.bf16.mxu0 %v793
    %1037 = vmatpush1.bf16.msra.mxu0 %v792
    %1038 = vmatprep.subr.bf16.mxu0 %v797
    %1039 = vmatpush1.bf16.msra.mxu0 %v796
    %1040 = vmatprep.subr.bf16.mxu0 %v801
    %1041 = vmatpush1.bf16.msra.mxu0 %v800
    %1042 = vmatprep.subr.bf16.mxu0 %v805
    %1043 = vmatpush1.bf16.msra.mxu0 %v804
    %1044 = vmatprep.subr.bf16.mxu0 %v809
    %1045 = vmatpush1.bf16.msra.mxu0 %v808
    %1046 = vmatprep.subr.bf16.mxu0 %v813
    %1047 = vmatpush1.bf16.msra.mxu0 %v812
    %1048 = vmatprep.subr.bf16.mxu0 %v817
    %1049 = vmatpush1.bf16.msra.mxu0 %v816
    %1050 = vmatprep.subr.bf16.mxu0 %v821
    %1051 = vmatpush1.bf16.msra.mxu0 %v820
    %1052 = vmatprep.subr.bf16.mxu0 %v825
    %1053 = vmatpush1.bf16.msra.mxu0 %v824
    %1054 = vmatprep.subr.bf16.mxu0 %v829
    %1055 = vmatpush1.bf16.msra.mxu0 %v828
    %1056 = vmatprep.mubr.bf16.mxu0 %v231
    %1057 = vmatmul.mubr.bf16.gmra.mrb[0].mxu0 %v230
    %v1058 = vpop.f32.mrb[0].mxu0
    %v1059 = vadd.f32 %v367, %v1058
    %v1060 = vpop.f32.mrb[0].mxu0
    %v1061 = vadd.f32 %v371, %v1060
    %v1062 = vpop.f32.mrb[0].mxu0
    %v1063 = vpop.f32.mrb[0].mxu0
    %1064 = vdwg.mxu0
    %1065 = vmatprep.subr.bf16.mxu0 %v833
    %1066 = vmatpush1.bf16.msra.mxu0 %v832
    %1067 = vmatprep.subr.bf16.mxu0 %v837
    %1068 = vmatpush1.bf16.msra.mxu0 %v836
    %1069 = vmatprep.subr.bf16.mxu0 %v841
    %1070 = vmatpush1.bf16.msra.mxu0 %v840
    %1071 = vmatprep.subr.bf16.mxu0 %v845
    %1072 = vmatpush1.bf16.msra.mxu0 %v844
    %1073 = vmatprep.subr.bf16.mxu0 %v849
    %1074 = vmatpush1.bf16.msra.mxu0 %v848
    %1075 = vmatprep.subr.bf16.mxu0 %v853
    %1076 = vmatpush1.bf16.msra.mxu0 %v852
    %1077 = vmatprep.subr.bf16.mxu0 %v857
    %1078 = vmatpush1.bf16.msra.mxu0 %v856
    %1079 = vmatprep.subr.bf16.mxu0 %v861
    %1080 = vmatpush1.bf16.msra.mxu0 %v860
    %1081 = vmatprep.subr.bf16.mxu0 %v865
    %1082 = vmatpush1.bf16.msra.mxu0 %v864
    %1083 = vmatprep.subr.bf16.mxu0 %v869
    %1084 = vmatpush1.bf16.msra.mxu0 %v868
    %1085 = vmatprep.subr.bf16.mxu0 %v873
    %1086 = vmatpush1.bf16.msra.mxu0 %v872
    %1087 = vmatprep.subr.bf16.mxu0 %v877
    %1088 = vmatpush1.bf16.msra.mxu0 %v876
    %1089 = vmatprep.subr.bf16.mxu0 %v881
    %1090 = vmatpush1.bf16.msra.mxu0 %v880
    %1091 = vmatprep.subr.bf16.mxu0 %v885
    %1092 = vmatpush1.bf16.msra.mxu0 %v884
    %1093 = vmatprep.subr.bf16.mxu0 %v889
    %1094 = vmatpush1.bf16.msra.mxu0 %v888
    %1095 = vmatprep.subr.bf16.mxu0 %v893
    %1096 = vmatpush1.bf16.msra.mxu0 %v892
    %1097 = vmatprep.mubr.bf16.mxu0 %v233
    %1098 = vmatmul.mubr.bf16.gmra.mrb[0].mxu0 %v232
    %v1099 = vpop.f32.mrb[0].mxu0
    %v1100 = vadd.f32 %v1059, %v1099
    %v1101 = vpop.f32.mrb[0].mxu0
    %v1102 = vadd.f32 %v1061, %v1101
    %v1103 = vpop.f32.mrb[0].mxu0
    %v1104 = vpop.f32.mrb[0].mxu0
    %1105 = vdwg.mxu0
    %1106 = vmatprep.subr.bf16.mxu0 %v771
    %1107 = vmatpush1.bf16.msra.mxu0 %v770
    %1108 = vmatprep.subr.bf16.mxu0 %v775
    %1109 = vmatpush1.bf16.msra.mxu0 %v774
    %1110 = vmatprep.subr.bf16.mxu0 %v779
    %1111 = vmatpush1.bf16.msra.mxu0 %v778
    %1112 = vmatprep.subr.bf16.mxu0 %v783
    %1113 = vmatpush1.bf16.msra.mxu0 %v782
    %1114 = vmatprep.subr.bf16.mxu0 %v787
    %1115 = vmatpush1.bf16.msra.mxu0 %v786
    %1116 = vmatprep.subr.bf16.mxu0 %v791
    %1117 = vmatpush1.bf16.msra.mxu0 %v790
    %1118 = vmatprep.subr.bf16.mxu0 %v795
    %1119 = vmatpush1.bf16.msra.mxu0 %v794
    %1120 = vmatprep.subr.bf16.mxu0 %v799
    %1121 = vmatpush1.bf16.msra.mxu0 %v798
    %1122 = vmatprep.subr.bf16.mxu0 %v803
    %1123 = vmatpush1.bf16.msra.mxu0 %v802
    %1124 = vmatprep.subr.bf16.mxu0 %v807
    %1125 = vmatpush1.bf16.msra.mxu0 %v806
    %1126 = vmatprep.subr.bf16.mxu0 %v811
    %1127 = vmatpush1.bf16.msra.mxu0 %v810
    %1128 = vmatprep.subr.bf16.mxu0 %v815
    %1129 = vmatpush1.bf16.msra.mxu0 %v814
    %1130 = vmatprep.subr.bf16.mxu0 %v819
    %1131 = vmatpush1.bf16.msra.mxu0 %v818
    %1132 = vmatprep.subr.bf16.mxu0 %v823
    %1133 = vmatpush1.bf16.msra.mxu0 %v822
    %1134 = vmatprep.subr.bf16.mxu0 %v827
    %1135 = vmatpush1.bf16.msra.mxu0 %v826
    %1136 = vmatprep.subr.bf16.mxu0 %v831
    %1137 = vmatpush1.bf16.msra.mxu0 %v830
    %1138 = vmatprep.mubr.bf16.mxu0 %v231
    %1139 = vmatmul.mubr.bf16.gmra.mrb[0].mxu0 %v230
    %v1140 = vpop.f32.mrb[0].mxu0
    %v1141 = vadd.f32 %v375, %v1140
    %v1142 = vpop.f32.mrb[0].mxu0
    %v1143 = vadd.f32 %v379, %v1142
    %v1144 = vpop.f32.mrb[0].mxu0
    %v1145 = vpop.f32.mrb[0].mxu0
    %1146 = vdwg.mxu0
    %1147 = vmatprep.subr.bf16.mxu0 %v835
    %1148 = vmatpush1.bf16.msra.mxu0 %v834
    %1149 = vmatprep.subr.bf16.mxu0 %v839
    %1150 = vmatpush1.bf16.msra.mxu0 %v838
    %1151 = vmatprep.subr.bf16.mxu0 %v843
    %1152 = vmatpush1.bf16.msra.mxu0 %v842
    %1153 = vmatprep.subr.bf16.mxu0 %v847
    %1154 = vmatpush1.bf16.msra.mxu0 %v846
    %1155 = vmatprep.subr.bf16.mxu0 %v851
    %1156 = vmatpush1.bf16.msra.mxu0 %v850
    %1157 = vmatprep.subr.bf16.mxu0 %v855
    %1158 = vmatpush1.bf16.msra.mxu0 %v854
    %1159 = vmatprep.subr.bf16.mxu0 %v859
    %1160 = vmatpush1.bf16.msra.mxu0 %v858
    %1161 = vmatprep.subr.bf16.mxu0 %v863
    %1162 = vmatpush1.bf16.msra.mxu0 %v862
    %1163 = vmatprep.subr.bf16.mxu0 %v867
    %1164 = vmatpush1.bf16.msra.mxu0 %v866
    %1165 = vmatprep.subr.bf16.mxu0 %v871
    %1166 = vmatpush1.bf16.msra.mxu0 %v870
    %1167 = vmatprep.subr.bf16.mxu0 %v875
    %1168 = vmatpush1.bf16.msra.mxu0 %v874
    %1169 = vmatprep.subr.bf16.mxu0 %v879
    %1170 = vmatpush1.bf16.msra.mxu0 %v878
    %1171 = vmatprep.subr.bf16.mxu0 %v883
    %1172 = vmatpush1.bf16.msra.mxu0 %v882
    %1173 = vmatprep.subr.bf16.mxu0 %v887
    %1174 = vmatpush1.bf16.msra.mxu0 %v886
    %1175 = vmatprep.subr.bf16.mxu0 %v891
    %1176 = vmatpush1.bf16.msra.mxu0 %v890
    %1177 = vmatprep.subr.bf16.mxu0 %v895
    %1178 = vmatpush1.bf16.msra.mxu0 %v894
    %1179 = vmatprep.mubr.bf16.mxu0 %v233
    %1180 = vmatmul.mubr.bf16.gmra.mrb[0].mxu0 %v232
    %v1181 = vpop.f32.mrb[0].mxu0
    %v1182 = vadd.f32 %v1141, %v1181
    %v1183 = vpop.f32.mrb[0].mxu0
    %v1184 = vadd.f32 %v1143, %v1183
    %v1185 = vpop.f32.mrb[0].mxu0
    %v1186 = vpop.f32.mrb[0].mxu0
    %1187 = vdwg.mxu0
    %v1188 = vmax.f32 %v1100, 0.0
    %v1189 = vmax.f32 %v1102, 0.0
    %v1190 = vmax.f32 %v1182, 0.0
    %v1191 = vmax.f32 %v1184, 0.0
    %v1192 = vld [vmem:[%s5] sm:$0xf]
    %v1193 = vunpack.c.l.bf16 %v1192
    %v1195 = vlaneseq
    %v1196 = vshrl.u32 %v1195, 7
    %v1197 = vsub.s32 0, %v1196
    %v1198 = vrot.slane %v1193, %v1197
    %v1199 = vlaneseq
    %v1200 = vshrl.u32 %v1199, 7
    %v1201 = vsub.s32 2, %v1200
    %v1202 = vrot.slane %v1193, %v1201
    %v1203 = vlaneseq
    %v1204 = vshrl.u32 %v1203, 7
    %v1205 = vsub.s32 4, %v1204
    %v1206 = vrot.slane %v1193, %v1205
    %v1207 = vlaneseq
    %v1208 = vshrl.u32 %v1207, 7
    %v1209 = vsub.s32 6, %v1208
    %v1210 = vrot.slane %v1193, %v1209
    %v1215 = vlaneseq
    %v1216 = vshrl.u32 %v1215, 7
    %v1217 = vsub.s32 0, %v1216
    %v1218 = vrot.slane %v1198, %v1217
    %v1219 = vlaneseq
    %v1220 = vshrl.u32 %v1219, 7
    %v1221 = vsub.s32 0, %v1220
    %v1222 = vrot.slane %v1202, %v1221
    %v1223 = vlaneseq
    %v1224 = vshrl.u32 %v1223, 7
    %v1225 = vsub.s32 0, %v1224
    %v1226 = vrot.slane %v1206, %v1225
    %v1227 = vlaneseq
    %v1228 = vshrl.u32 %v1227, 7
    %v1229 = vsub.s32 0, %v1228
    %v1230 = vrot.slane %v1210, %v1229
    %v1231 = vmul.f32 %v1188, %v1218
    %v1232 = vmul.f32 %v1189, %v1222
    %v1233 = vmul.f32 %v1190, %v1226
    %v1234 = vmul.f32 %v1191, %v1230
    %v1235 = vadd.f32 %v1231, %v1232
    %v1236 = vadd.f32 %v1235, %v1233
    %v1237 = vadd.f32 %v1236, %v1234
    %1238 = vadd.xlane.f32.xlu0 %v1237
    %v1239 = vpop.xlane.xlu0 %1238
    %s1240 = sld [smem:[#allocation2]]
    %v1241 = vstv %s1240
    %v1242 = vadd.f32 %v1239, %v1241
    %vm1243 = vcmask 7168
    %1244 = vst.msk [vmem:[%s7] sm:$0xff] %vm1243, %v1242
    // Predicated region
    $region42: #{tpu_custom_call.1} parent=1 // pred_check
      _
    $region43: #{tpu_custom_call.1} parent=1 // pred_check_branch
      %1246 = sbr.rel (0) target = $region45
    $region44: #{tpu_custom_call.1} parent=1 // pred_region
      _
    $region45: #{tpu_custom_call.1} parent=1 // pred_fallthru
      _
    // Predicated region
    $region46: #{tpu_custom_call.1} parent=1 // pred_check
      _
    $region47: #{tpu_custom_call.1} parent=1 // pred_check_branch
      %1248 = sbr.rel (0) target = $region49
    $region48: #{tpu_custom_call.1} parent=1 // pred_region
      _
    $region49: #{tpu_custom_call.1} parent=1 // pred_fallthru
      _
    %1249 = vsyncpa [#allocation4], 1
    %1250 = vsyncpa [#allocation6], 1

</llo_original>
